<compile_context>
chip_gen: v7x
topology: tpu7x:2x2x1
jax: 0.10.0
libtpu: 0.0.40
codegen_flags: <defaults>
</compile_context>

<pallas_src>
import functools

import jax
import jax.numpy as jnp
from jax.experimental import pallas as pl
from jax.experimental.pallas import tpu as pltpu

_LANES = 128


def _round_up(x, m):
    return (x + m - 1) // m * m


# ----------------------------------------------------------------------------
# Kernel 1: fused matmul + per-channel affine + activation
# ----------------------------------------------------------------------------
def _mm_affine_act_kernel(x_ref, w_ref, s_ref, b_ref, o_ref, *, act):
    # x: (tm, Cin)   w: (Cin, tn)   s/b: (1, tn)   o: (tm, tn)
    y = jnp.dot(x_ref[...], w_ref[...], preferred_element_type=jnp.float32)
    y = y * s_ref[...] + b_ref[...]
    if act == "silu":
        y = y * jax.nn.sigmoid(y)
    elif act == "gelu":
        y = jax.nn.gelu(y, approximate=False)   # torch nn.GELU default (erf)
    o_ref[...] = y.astype(o_ref.dtype)


def fused_pointwise(x2d, w, scale, bias, act="none", *, tm=512):
    """(M, Cin) @ (Cin, Cout) * scale + bias, then activation.

    scale/bias: (1, Cout).  Cout is zero-padded up to a multiple of 128 so the
    output stores are lane-dense; M is padded up to the row tile.  The (small)
    contraction dim Cin stays fully resident in VMEM."""
    M, Cin = x2d.shape
    Cout = w.shape[1]
    Np = _round_up(Cout, _LANES)

    # column tile that divides Np (Np is always a multiple of 128)
    tn = Np
    for cand in (512, 384, 256, 128):
        if Np >= cand and Np % cand == 0:
            tn = cand
            break

    tm = min(_round_up(tm, 8), _round_up(M, 8))
    Mp = _round_up(M, tm)

    xp = x2d if Mp == M else jnp.pad(x2d, ((0, Mp - M), (0, 0)))
    wp = w if Np == Cout else jnp.pad(w, ((0, 0), (0, Np - Cout)))
    sp = scale if Np == Cout else jnp.pad(scale, ((0, 0), (0, Np - Cout)))
    bp = bias if Np == Cout else jnp.pad(bias, ((0, 0), (0, Np - Cout)))

    out = pl.pallas_call(
        functools.partial(_mm_affine_act_kernel, act=act),
        out_shape=jax.ShapeDtypeStruct((Mp, Np), x2d.dtype),
        grid_spec=pltpu.PrefetchScalarGridSpec(
            num_scalar_prefetch=0,
            grid=(Mp // tm, Np // tn),
            in_specs=[
                pl.BlockSpec((tm, Cin), lambda i, j: (i, 0)),   # activations
                pl.BlockSpec((Cin, tn), lambda i, j: (0, j)),   # weights (resident per j)
                pl.BlockSpec((1, tn), lambda i, j: (0, j)),     # folded scale
                pl.BlockSpec((1, tn), lambda i, j: (0, j)),     # folded bias
            ],
            out_specs=pl.BlockSpec((tm, tn), lambda i, j: (i, j)),
        ),
        compiler_params=pltpu.CompilerParams(
            dimension_semantics=("parallel", "parallel")),
    )(xp, wp, sp, bp)
    return out[:M, :Cout]


def _pointwise_ref(x2d, w, scale, bias, act):
    y = x2d @ w * scale + bias
    if act == "silu":
        y = y * jax.nn.sigmoid(y)
    elif act == "gelu":
        y = jax.nn.gelu(y, approximate=False)
    return y


def _pointwise(x2d, w, scale, bias, act, use_pallas):
    if use_pallas:
        return fused_pointwise(x2d, w, scale, bias, act)
    return _pointwise_ref(x2d, w, scale, bias, act)


# ----------------------------------------------------------------------------
# Kernel 2: depthwise 3x3 conv + LayerNorm(C) + GELU (DCNv3 offset branch)
# ----------------------------------------------------------------------------
def _dwconv_ln_gelu_kernel(x_ref, w_ref, b_ref, g_ref, bb_ref, o_ref, *, hw, k, eps):
    H, W = hw
    C = o_ref.shape[-1]
    x = x_ref[...].astype(jnp.float32)            # (1, H+k-1, W+k-1, C)
    w = w_ref[...].astype(jnp.float32)            # (k*k, C)
    acc = jnp.zeros((1, H, W, C), jnp.float32)
    for t in range(k * k):                        # static, unrolled taps
        dy, dx = t // k, t % k
        tap = w[t:t + 1, :].reshape(1, 1, 1, C)
        acc = acc + x[:, dy:dy + H, dx:dx + W, :] * tap
    acc = acc + b_ref[...].reshape(1, 1, 1, C)    # conv bias
    mu = jnp.mean(acc, axis=-1, keepdims=True)    # LayerNorm over channels
    var = jnp.mean(jnp.square(acc - mu), axis=-1, keepdims=True)
    y = (acc - mu) * jax.lax.rsqrt(var + eps)
    y = y * g_ref[...].reshape(1, 1, 1, C) + bb_ref[...].reshape(1, 1, 1, C)
    y = jax.nn.gelu(y, approximate=False)
    o_ref[...] = y.astype(o_ref.dtype)


def dwconv_ln_gelu(x_nhwc, w_taps, b, ln_g, ln_b, *, k=3, eps=1e-5):
    B, H, W, C = x_nhwc.shape
    p = (k - 1) // 2
    xp = jnp.pad(x_nhwc, ((0, 0), (p, p), (p, p), (0, 0)))
    kern = functools.partial(_dwconv_ln_gelu_kernel, hw=(H, W), k=k, eps=eps)
    return pl.pallas_call(
        kern,
        out_shape=jax.ShapeDtypeStruct((B, H, W, C), x_nhwc.dtype),
        grid_spec=pltpu.PrefetchScalarGridSpec(
            num_scalar_prefetch=0,
            grid=(B,),
            in_specs=[
                pl.BlockSpec((1, H + 2 * p, W + 2 * p, C), lambda b_: (b_, 0, 0, 0)),
                pl.BlockSpec((k * k, C), lambda b_: (0, 0)),
                pl.BlockSpec((1, C), lambda b_: (0, 0)),
                pl.BlockSpec((1, C), lambda b_: (0, 0)),
                pl.BlockSpec((1, C), lambda b_: (0, 0)),
            ],
            out_specs=pl.BlockSpec((1, H, W, C), lambda b_: (b_, 0, 0, 0)),
        ),
        compiler_params=pltpu.CompilerParams(dimension_semantics=("parallel",)),
    )(xp, w_taps, b, ln_g, ln_b)


def _dwconv_ln_gelu_ref(x, w_taps, b, ln_g, ln_b, *, k=3, eps=1e-5):
    B, H, W, C = x.shape
    p = (k - 1) // 2
    xp = jnp.pad(x, ((0, 0), (p, p), (p, p), (0, 0)))
    acc = jnp.zeros((B, H, W, C), jnp.float32)
    for t in range(k * k):
        dy, dx = t // k, t % k
        acc = acc + xp[:, dy:dy + H, dx:dx + W, :] * w_taps[t]
    acc = acc + b
    mu = jnp.mean(acc, axis=-1, keepdims=True)
    var = jnp.mean(jnp.square(acc - mu), axis=-1, keepdims=True)
    y = (acc - mu) * jax.lax.rsqrt(var + eps) * ln_g + ln_b
    return jax.nn.gelu(y, approximate=False)


def _dwconv(x, p, use_pallas):
    if use_pallas:
        return dwconv_ln_gelu(x, p["dw_w"], p["dw_b"], p["ln_g"], p["ln_b"], k=p["k"])
    return _dwconv_ln_gelu_ref(x, p["dw_w"], p["dw_b"], p["ln_g"], p["ln_b"], k=p["k"])


# ----------------------------------------------------------------------------
# DCNv3 deformable sampling (plain JAX — data-dependent gather)
# ----------------------------------------------------------------------------
def _dcnv3_sample(v, offset, mask, *, k, pad, dil, stride, offset_scale=1.0):
    """v: (B,H,W,C) value projection; offset: (B,Ho,Wo,G,P,2) (x,y) in pixels;
    mask: (B,Ho,Wo,G,P) (already softmaxed).  Bilinear sampling of the
    zero-padded value map (grid_sample align_corners=False / padding 'zeros')."""
    B, H, W, C = v.shape
    G, P = mask.shape[3], mask.shape[4]
    gc = C // G
    Hp, Wp = H + 2 * pad, W + 2 * pad
    Ho, Wo = offset.shape[1], offset.shape[2]

    vp = jnp.pad(v, ((0, 0), (pad, pad), (pad, pad), (0, 0)))
    f32 = jnp.float32
    base_y = (dil * (k - 1)) // 2 + stride * jnp.arange(Ho, dtype=f32)
    base_x = (dil * (k - 1)) // 2 + stride * jnp.arange(Wo, dtype=f32)
    tap = jnp.arange(k, dtype=f32) * dil - (dil * (k - 1)) // 2
    gy = jnp.repeat(tap, k)          # row-major over (kh, kw)
    gx = jnp.tile(tap, k)

    # absolute sampling coords in padded-pixel units (the +0.5 pixel-center of
    # the reference points and the -0.5 align_corners=False shift cancel).
    py = base_y[None, :, None, None, None] + (gy + offset[..., 1]) * offset_scale
    px = base_x[None, None, :, None, None] + (gx + offset[..., 0]) * offset_scale

    y0 = jnp.floor(py)
    x0 = jnp.floor(px)
    wy1 = py - y0
    wx1 = px - x0
    corners = [(y0, x0, (1.0 - wy1) * (1.0 - wx1)),
               (y0, x0 + 1.0, (1.0 - wy1) * wx1),
               (y0 + 1.0, x0, wy1 * (1.0 - wx1)),
               (y0 + 1.0, x0 + 1.0, wy1 * wx1)]

    v_t = vp.reshape(B, Hp * Wp, G, gc).transpose(0, 2, 1, 3)        # (B,G,S,gc)
    gather = jax.vmap(jax.vmap(lambda val, idx: jnp.take(val, idx, axis=0)))

    out = jnp.zeros((B, G, Ho * Wo * P, gc), f32)
    for yi, xi, wgt in corners:
        valid = (yi >= 0) & (yi < Hp) & (xi >= 0) & (xi < Wp)
        wgt = jnp.where(valid, wgt, 0.0)
        flat = (jnp.clip(yi, 0, Hp - 1) * Wp + jnp.clip(xi, 0, Wp - 1)).astype(jnp.int32)
        flat = flat.transpose(0, 3, 1, 2, 4).reshape(B, G, Ho * Wo * P)
        wgt = wgt.transpose(0, 3, 1, 2, 4).reshape(B, G, Ho * Wo * P)
        out = out + gather(v_t, flat) * wgt[..., None]

    out = out.reshape(B, G, Ho * Wo, P, gc)
    m = mask.transpose(0, 3, 1, 2, 4).reshape(B, G, Ho * Wo, P)
    out = (out * m[..., None]).sum(axis=3)                           # (B,G,Q,gc)
    return out.transpose(0, 2, 1, 3).reshape(B, Ho, Wo, C)


# ----------------------------------------------------------------------------
# Module forward (DCNV3_YOLO / Bottleneck / DCNV3_CSP), NHWC internally
# ----------------------------------------------------------------------------
def _dcnv3_yolo(x, p, use_pallas):
    """DCNV3_YOLO (inc == ouc): DCNv3 (NHWC) -> BatchNorm -> SiLU.
    The NCHW<->NHWC permutes are identities here (we already carry NHWC);
    BN + SiLU are folded into the output_proj matmul epilogue."""
    B, H, W, C = x.shape
    M = B * H * W
    G, K = p["group"], p["k"]
    P = K * K
    one_c = jnp.ones((1, C), x.dtype)

    x2d = x.reshape(M, C)
    v = _pointwise(x2d, p["wi"], one_c, p["bi"], "none", use_pallas)      # input_proj
    x1 = _dwconv(x, p, use_pallas).reshape(M, C)                          # offset branch
    off = _pointwise(x1, p["w_off"], jnp.ones((1, G * P * 2), x.dtype),
                     p["b_off"], "none", use_pallas)
    msk = _pointwise(x1, p["w_msk"], jnp.ones((1, G * P), x.dtype),
                     p["b_msk"], "none", use_pallas)
    msk = jax.nn.softmax(msk.reshape(B, H, W, G, P), axis=-1)
    off = off.reshape(B, H, W, G, P, 2)

    samp = _dcnv3_sample(v.reshape(B, H, W, C), off, msk,
                         k=K, pad=p["pad"], dil=p["dil"], stride=p["stride"])

    # output_proj Linear, then DCNV3_YOLO BatchNorm + SiLU, all in one kernel
    out = _pointwise(samp.reshape(M, C), p["wo"], p["bn_s"],
                     p["bo"] * p["bn_s"] + p["bn_t"], "silu", use_pallas)
    return out.reshape(B, H, W, C)


def _bottleneck(x, p, use_pallas):
    h = _dcnv3_yolo(x, p["cv1"], use_pallas)
    h = _dcnv3_yolo(h, p["cv2"], use_pallas)
    return x + h if p["add"] else h


def _conv1x1_bn_silu(x, p, use_pallas):
    B, H, W, Cin = x.shape
    Cout = p["w"].shape[1]
    y = _pointwise(x.reshape(B * H * W, Cin), p["w"], p["s"], p["t"], "silu", use_pallas)
    return y.reshape(B, H, W, Cout)


def dcnv3_csp_forward(x_nchw, params, use_pallas=True):
    x = jnp.transpose(x_nchw, (0, 2, 3, 1))        # NCHW -> NHWC (channels on lanes)
    y = _conv1x1_bn_silu(x, params["cv1"], use_pallas)
    c = params["c"]
    ys = [y[..., :c], y[..., c:]]                  # chunk(2, dim=channels)
    for bp in params["m"]:
        ys.append(_bottleneck(ys[-1], bp, use_pallas))
    cat = jnp.concatenate(ys, axis=-1)
    out = _conv1x1_bn_silu(cat, params["cv2"], use_pallas)
    return jnp.transpose(out, (0, 3, 1, 2))        # back to NCHW


# ----------------------------------------------------------------------------
# Parameter construction (deterministic, eval-mode BN folded to scale/bias)
# ----------------------------------------------------------------------------
def _fold_bn(key, c, eps=1e-5):
    k1, k2, k3, k4 = jax.random.split(key, 4)
    gamma = 1.0 + 0.1 * jax.random.normal(k1, (c,), jnp.float32)
    beta = 0.1 * jax.random.normal(k2, (c,), jnp.float32)
    mean = 0.1 * jax.random.normal(k3, (c,), jnp.float32)
    var = jax.random.uniform(k4, (c,), jnp.float32, minval=0.5, maxval=1.5)
    s = gamma * jax.lax.rsqrt(var + eps)
    t = beta - mean * s
    return s.reshape(1, c), t.reshape(1, c)


def _make_conv_bn(key, cin, cout):
    kw, kb = jax.random.split(key)
    w = jax.random.normal(kw, (cin, cout), jnp.float32) / jnp.sqrt(cin)   # (in,out)=W.T
    s, t = _fold_bn(kb, cout)
    return {"w": w, "s": s, "t": t}


def _make_dcnv3_yolo(key, c, group=1, k=3):
    ks = jax.random.split(key, 12)
    P = k * k
    bn_s, bn_t = _fold_bn(ks[4], c)
    return {
        "group": group, "k": k, "pad": (k - 1) // 2, "dil": 1, "stride": 1,
        "wi": jax.random.normal(ks[0], (c, c), jnp.float32) / jnp.sqrt(c),
        "bi": 0.1 * jax.random.normal(ks[1], (1, c), jnp.float32),
        "wo": jax.random.normal(ks[2], (c, c), jnp.float32) / jnp.sqrt(c),
        "bo": 0.1 * jax.random.normal(ks[3], (1, c), jnp.float32),
        "bn_s": bn_s, "bn_t": bn_t,
        "dw_w": 0.2 * jax.random.normal(ks[5], (P, c), jnp.float32),
        "dw_b": 0.1 * jax.random.normal(ks[6], (1, c), jnp.float32),
        "ln_g": 1.0 + 0.1 * jax.random.normal(ks[7], (1, c), jnp.float32),
        "ln_b": 0.1 * jax.random.normal(ks[8], (1, c), jnp.float32),
        "w_off": 0.05 * jax.random.normal(ks[9], (c, group * P * 2), jnp.float32),
        "b_off": 0.05 * jax.random.normal(ks[10], (1, group * P * 2), jnp.float32),
        "w_msk": 0.1 * jax.random.normal(ks[11], (c, group * P), jnp.float32),
        "b_msk": jnp.zeros((1, group * P), jnp.float32),
    }


if __name__ == "__main__":
    # DCNV3_CSP(c1=32, c2=32, n=1, shortcut=False, g=1, e=0.5) -> c = 16
    B, C1, H, W = 2, 32, 8, 8
    C2, n, e, g = 32, 1, 0.5, 1
    c = int(C2 * e)

    root = jax.random.PRNGKey(0)
    keys = jax.random.split(root, 3 + n)
    kx, k1, k2 = keys[0], keys[1], keys[2]
    km = keys[3:]

    x = jax.random.normal(kx, (B, C1, H, W), dtype=jnp.float32)
    params = {
        "c": c,
        "cv1": _make_conv_bn(k1, C1, 2 * c),
        "cv2": _make_conv_bn(k2, (2 + n) * c, C2),
        "m": [{"cv1": _make_dcnv3_yolo(jax.random.fold_in(km[i], 0), c, group=g),
               "cv2": _make_dcnv3_yolo(jax.random.fold_in(km[i], 1), c, group=g),
               "add": False}                      # DCNV3_CSP default shortcut=False
              for i in range(n)],
    }

    out = dcnv3_csp_forward(x, params, use_pallas=True)
    out = jax.block_until_ready(out)

    ref = dcnv3_csp_forward(x, params, use_pallas=False)
    ref = jax.block_until_ready(ref)

    assert out.shape == (B, C2, H, W), out.shape
    assert jnp.allclose(out, ref, atol=2e-3, rtol=2e-3), (
        float(jnp.max(jnp.abs(out - ref))))
    print("KERNEL_OK")
</pallas_src>

<mosaic_0001>
module attributes {stable_mosaic.version = 11 : i64} {
  func.func @_mm_affine_act_kernel(%arg0: i32, %arg1: i32, %arg2: memref<128x32xf32, #tpu.memory_space<vmem>>, %arg3: memref<32x128xf32, #tpu.memory_space<vmem>>, %arg4: memref<1x128xf32, #tpu.memory_space<vmem>>, %arg5: memref<1x128xf32, #tpu.memory_space<vmem>>, %arg6: memref<128x128xf32, #tpu.memory_space<vmem>>) attributes {dimension_semantics = [#tpu.dimension_semantics<parallel>, #tpu.dimension_semantics<parallel>], iteration_bounds = array<i64: 1, 1>, scalar_prefetch = 0 : i64, scratch_operands = 0 : i64, tpu.core_type = #tpu.core_type<tc>, window_params = [{transform_indices = @transform_0, window_bounds = array<i64: 128, 32>}, {transform_indices = @transform_1, window_bounds = array<i64: 32, 128>}, {transform_indices = @transform_2, window_bounds = array<i64: 1, 128>}, {transform_indices = @transform_3, window_bounds = array<i64: 1, 128>}, {transform_indices = @transform_4, window_bounds = array<i64: 128, 128>}]} {
    %c0 = arith.constant 0 : index
    %c0_0 = arith.constant 0 : index
    %0 = vector.load %arg2[%c0, %c0_0] : memref<128x32xf32, #tpu.memory_space<vmem>>, vector<128x32xf32>
    %c0_1 = arith.constant 0 : index
    %c0_2 = arith.constant 0 : index
    %1 = vector.load %arg3[%c0_1, %c0_2] : memref<32x128xf32, #tpu.memory_space<vmem>>, vector<32x128xf32>
    %cst = arith.constant dense<0.000000e+00> : vector<128x128xf32>
    %2 = tpu.matmul %0, %1, %cst {dimension_numbers = #tpu.dot_dimension_numbers<[1], [0], [0], [1], [0, 0, 1, 1], [], []>} : vector<128x32xf32>, vector<32x128xf32>, vector<128x128xf32> -> vector<128x128xf32>
    %c0_3 = arith.constant 0 : index
    %c0_4 = arith.constant 0 : index
    %3 = vector.load %arg4[%c0_3, %c0_4] : memref<1x128xf32, #tpu.memory_space<vmem>>, vector<1x128xf32>
    %4 = vector.broadcast %3 : vector<1x128xf32> to vector<128x128xf32>
    %5 = arith.mulf %2, %4 : vector<128x128xf32>
    %c0_5 = arith.constant 0 : index
    %c0_6 = arith.constant 0 : index
    %6 = vector.load %arg5[%c0_5, %c0_6] : memref<1x128xf32, #tpu.memory_space<vmem>>, vector<1x128xf32>
    %7 = vector.broadcast %6 : vector<1x128xf32> to vector<128x128xf32>
    %8 = arith.addf %5, %7 : vector<128x128xf32>
    %9 = arith.negf %8 : vector<128x128xf32>
    %10 = math.exp %9 : vector<128x128xf32>
    %cst_7 = arith.constant 1.000000e+00 : f32
    %11 = vector.broadcast %cst_7 : f32 to vector<128x128xf32>
    %12 = arith.addf %11, %10 : vector<128x128xf32>
    %13 = arith.divf %11, %12 : vector<128x128xf32>
    %14 = arith.mulf %8, %13 : vector<128x128xf32>
    %c0_8 = arith.constant 0 : index
    %c0_9 = arith.constant 0 : index
    %15 = vector.load %arg6[%c0_8, %c0_9] : memref<128x128xf32, #tpu.memory_space<vmem>>, vector<128x128xf32>
    tpu.vector_store %arg6[%c0_8, %c0_9], %14 {strides = array<i32>} : memref<128x128xf32, #tpu.memory_space<vmem>>, vector<128x128xf32>,
    return
  }
  func.func @transform_0(%arg0: i32, %arg1: i32) -> (i32, i32) {
    %c0_i32 = arith.constant 0 : i32
    %c0_i32_0 = arith.constant 0 : i32
    return %arg0, %c0_i32 : i32, i32
  }
  func.func @transform_1(%arg0: i32, %arg1: i32) -> (i32, i32) {
    %c0_i32 = arith.constant 0 : i32
    %c0_i32_0 = arith.constant 0 : i32
    return %c0_i32, %arg1 : i32, i32
  }
  func.func @transform_2(%arg0: i32, %arg1: i32) -> (i32, i32) {
    %c0_i32 = arith.constant 0 : i32
    %c0_i32_0 = arith.constant 0 : i32
    return %c0_i32, %arg1 : i32, i32
  }
  func.func @transform_3(%arg0: i32, %arg1: i32) -> (i32, i32) {
    %c0_i32 = arith.constant 0 : i32
    %c0_i32_0 = arith.constant 0 : i32
    return %c0_i32, %arg1 : i32, i32
  }
  func.func @transform_4(%arg0: i32, %arg1: i32) -> (i32, i32) {
    %c0_i32 = arith.constant 0 : i32
    return %arg0, %arg1 : i32, i32
  }
}

</mosaic_0001>

<llo_original>
// kernel: tpu_custom_call.1
$region0: #{tpu_custom_call.1}
  #allocation0 [shape = 'u32[]', space=smem, size = 0x4, offset = 0x4, fixed_abs, tag = 'smem constant byte address 0x4 - core index']
  #allocation1 [shape = 'u32[144,128]{1,0:T(1,128)}', space=vmem, size = 0x12000, scoped, tag = 'internal scratch']
  %s0 = inlined_call_operand.vmem [shape: f32[128,32], index: 0, kind: input, shape index: {}]
  %s1 = inlined_call_operand.vmem [shape: f32[32,128], index: 1, kind: input, shape index: {}]
  %s2 = inlined_call_operand.vmem [shape: f32[1,128], index: 2, kind: input, shape index: {}]
  %s3 = inlined_call_operand.vmem [shape: f32[1,128], index: 3, kind: input, shape index: {}]
  %s4 = inlined_call_operand.hbm [shape: f32[128,128], index: 4, kind: output, shape index: {}]
  %s5 = sld [smem:[#allocation0]]
  $region26: #{tpu_custom_call.1} parent=0
    _
  %s7 = ssub.s32 1, %s5
  %s8 = scalar_select 0, %s7, %s5
  $region1: #{tpu_custom_call.1} parent=0
    #allocation2 [shape = 'u8[65536]{0}', space=vmem, size = 0x10000, scoped, tag = 'output window, operand 0, single buffered']
    #allocation3 [shape = 's32[1]{0}', space=sflag, size = 0x4, scoped, tag = 'scoped memory for tpu_custom_call.1']
    %9 = vsyncpa [#allocation3], 0
    // Predicated region
    $region2: #{tpu_custom_call.1} parent=1 // pred_check
      _
    $region3: #{tpu_custom_call.1} parent=1 // pred_check_branch
      %11 = sbr.rel (0) target = $region5
    $region4: #{tpu_custom_call.1} parent=1 // pred_region
      _
    $region5: #{tpu_custom_call.1} parent=1 // pred_fallthru
      _
    // Predicated region
    $region6: #{tpu_custom_call.1} parent=1 // pred_check
      _
    $region7: #{tpu_custom_call.1} parent=1 // pred_check_branch
      %13 = sbr.rel (0) target = $region9
    $region8: #{tpu_custom_call.1} parent=1 // pred_region
      _
    $region9: #{tpu_custom_call.1} parent=1 // pred_fallthru
      _
    // Predicated region
    $region10: #{tpu_custom_call.1} parent=1 // pred_check
      _
    $region11: #{tpu_custom_call.1} parent=1 // pred_check_branch
      %15 = sbr.rel (0) target = $region13
    $region12: #{tpu_custom_call.1} parent=1 // pred_region
      _
    $region13: #{tpu_custom_call.1} parent=1 // pred_fallthru
      _
    // Predicated region
    $region14: #{tpu_custom_call.1} parent=1 // pred_check
      _
    $region15: #{tpu_custom_call.1} parent=1 // pred_check_branch
      %17 = sbr.rel (0) target = $region17
    $region16: #{tpu_custom_call.1} parent=1 // pred_region
      _
    $region17: #{tpu_custom_call.1} parent=1 // pred_fallthru
      _
    %v18 = vld [vmem:[%s0] sm:$0xff]
    %v19 = vld [vmem:[%s0 + $0x8] sm:$0xff]
    %v20 = vld [vmem:[%s0 + $0x10] sm:$0xff]
    %v21 = vld [vmem:[%s0 + $0x18] sm:$0xff]
    %v22 = vld [vmem:[%s0 + $0x20] sm:$0xff]
    %v23 = vld [vmem:[%s0 + $0x28] sm:$0xff]
    %v24 = vld [vmem:[%s0 + $0x30] sm:$0xff]
    %v25 = vld [vmem:[%s0 + $0x38] sm:$0xff]
    %v26 = vld [vmem:[%s0 + $0x40] sm:$0xff]
    %v27 = vld [vmem:[%s0 + $0x48] sm:$0xff]
    %v28 = vld [vmem:[%s0 + $0x50] sm:$0xff]
    %v29 = vld [vmem:[%s0 + $0x58] sm:$0xff]
    %v30 = vld [vmem:[%s0 + $0x60] sm:$0xff]
    %v31 = vld [vmem:[%s0 + $0x68] sm:$0xff]
    %v32 = vld [vmem:[%s0 + $0x70] sm:$0xff]
    %v33 = vld [vmem:[%s0 + $0x78] sm:$0xff]
    %v34 = vld [vmem:[%s1] sm:$0xff]
    %v35 = vld [vmem:[%s1 + $0x8] sm:$0xff]
    %v36 = vld [vmem:[%s1 + $0x10] sm:$0xff]
    %v37 = vld [vmem:[%s1 + $0x18] sm:$0xff]
    %vm38 = vcmask 261120
    %v40 = vsel %vm38, %v18, 0
    %v43 = vsel %vm38, %v19, 0
    %v46 = vsel %vm38, %v20, 0
    %v49 = vsel %vm38, %v21, 0
    %v52 = vsel %vm38, %v22, 0
    %v55 = vsel %vm38, %v23, 0
    %v58 = vsel %vm38, %v24, 0
    %v61 = vsel %vm38, %v25, 0
    %v64 = vsel %vm38, %v26, 0
    %v67 = vsel %vm38, %v27, 0
    %v70 = vsel %vm38, %v28, 0
    %v73 = vsel %vm38, %v29, 0
    %v76 = vsel %vm38, %v30, 0
    %v79 = vsel %vm38, %v31, 0
    %v82 = vsel %vm38, %v32, 0
    %v85 = vsel %vm38, %v33, 0
    %87 = vmatprep.subr.mxu0 0.0
    %88 = vmatpush1.msra.mxu0 %v34
    %89 = vmatprep.subr.mxu0 0.0
    %90 = vmatpush1.msra.mxu0 %v35
    %91 = vmatprep.subr.mxu0 0.0
    %92 = vmatpush1.msra.mxu0 %v36
    %93 = vmatprep.subr.mxu0 0.0
    %94 = vmatpush1.msra.mxu0 %v37
    %95 = vmatprep.subr.mxu0 0.0
    %96 = vmatpush1.msra.mxu0 0.0
    %97 = vmatprep.subr.mxu0 0.0
    %98 = vmatpush1.msra.mxu0 0.0
    %99 = vmatprep.subr.mxu0 0.0
    %100 = vmatpush1.msra.mxu0 0.0
    %101 = vmatprep.subr.mxu0 0.0
    %102 = vmatpush1.msra.mxu0 0.0
    %103 = vmatprep.subr.mxu0 0.0
    %104 = vmatpush1.msra.mxu0 0.0
    %105 = vmatprep.subr.mxu0 0.0
    %106 = vmatpush1.msra.mxu0 0.0
    %107 = vmatprep.subr.mxu0 0.0
    %108 = vmatpush1.msra.mxu0 0.0
    %109 = vmatprep.subr.mxu0 0.0
    %110 = vmatpush1.msra.mxu0 0.0
    %111 = vmatprep.subr.mxu0 0.0
    %112 = vmatpush1.msra.mxu0 0.0
    %113 = vmatprep.subr.mxu0 0.0
    %114 = vmatpush1.msra.mxu0 0.0
    %115 = vmatprep.subr.mxu0 0.0
    %116 = vmatpush1.msra.mxu0 0.0
    %117 = vmatprep.subr.mxu0 0.0
    %118 = vmatpush1.msra.mxu0 0.0
    %119 = vmatprep.subr.mxu0 0.0
    %120 = vmatpush1.msra.mxu0 0.0
    %121 = vmatprep.subr.mxu0 0.0
    %122 = vmatpush1.msra.mxu0 0.0
    %123 = vmatprep.subr.mxu0 0.0
    %124 = vmatpush1.msra.mxu0 0.0
    %125 = vmatprep.subr.mxu0 0.0
    %126 = vmatpush1.msra.mxu0 0.0
    %127 = vmatprep.subr.mxu0 0.0
    %128 = vmatpush1.msra.mxu0 0.0
    %129 = vmatprep.subr.mxu0 0.0
    %130 = vmatpush1.msra.mxu0 0.0
    %131 = vmatprep.subr.mxu0 0.0
    %132 = vmatpush1.msra.mxu0 0.0
    %133 = vmatprep.subr.mxu0 0.0
    %134 = vmatpush1.msra.mxu0 0.0
    %135 = vmatprep.subr.mxu0 0.0
    %136 = vmatpush1.msra.mxu0 0.0
    %137 = vmatprep.subr.mxu0 0.0
    %138 = vmatpush1.msra.mxu0 0.0
    %139 = vmatprep.subr.mxu0 0.0
    %140 = vmatpush1.msra.mxu0 0.0
    %141 = vmatprep.subr.mxu0 0.0
    %142 = vmatpush1.msra.mxu0 0.0
    %143 = vmatprep.subr.mxu0 0.0
    %144 = vmatpush1.msra.mxu0 0.0
    %145 = vmatprep.subr.mxu0 0.0
    %146 = vmatpush1.msra.mxu0 0.0
    %147 = vmatprep.subr.mxu0 0.0
    %148 = vmatpush1.msra.mxu0 0.0
    %149 = vmatprep.subr.mxu0 0.0
    %150 = vmatpush1.msra.mxu0 0.0
    %151 = vmatprep.mubr.f32.mxu0 0.0
    %152 = vmatmul.mubr.f32.gmra.mrb[0].mxu0 %v40
    %v153 = vpop.f32.mrb[0].mxu0
    %v154 = vadd.f32 0.0, %v153
    %v155 = vpop.f32.mrb[0].mxu0
    %156 = vmatprep.mubr.f32.mxu0 0.0
    %157 = vmatmul.mubr.f32.gmra.mrb[0].mxu0 %v43
    %v158 = vpop.f32.mrb[0].mxu0
    %v159 = vadd.f32 0.0, %v158
    %v160 = vpop.f32.mrb[0].mxu0
    %161 = vmatprep.mubr.f32.mxu0 0.0
    %162 = vmatmul.mubr.f32.gmra.mrb[0].mxu0 %v46
    %v163 = vpop.f32.mrb[0].mxu0
    %v164 = vadd.f32 0.0, %v163
    %v165 = vpop.f32.mrb[0].mxu0
    %166 = vmatprep.mubr.f32.mxu0 0.0
    %167 = vmatmul.mubr.f32.gmra.mrb[0].mxu0 %v49
    %v168 = vpop.f32.mrb[0].mxu0
    %v169 = vadd.f32 0.0, %v168
    %v170 = vpop.f32.mrb[0].mxu0
    %171 = vmatprep.mubr.f32.mxu0 0.0
    %172 = vmatmul.mubr.f32.gmra.mrb[0].mxu0 %v52
    %v173 = vpop.f32.mrb[0].mxu0
    %v174 = vadd.f32 0.0, %v173
    %v175 = vpop.f32.mrb[0].mxu0
    %176 = vmatprep.mubr.f32.mxu0 0.0
    %177 = vmatmul.mubr.f32.gmra.mrb[0].mxu0 %v55
    %v178 = vpop.f32.mrb[0].mxu0
    %v179 = vadd.f32 0.0, %v178
    %v180 = vpop.f32.mrb[0].mxu0
    %181 = vmatprep.mubr.f32.mxu0 0.0
    %182 = vmatmul.mubr.f32.gmra.mrb[0].mxu0 %v58
    %v183 = vpop.f32.mrb[0].mxu0
    %v184 = vadd.f32 0.0, %v183
    %v185 = vpop.f32.mrb[0].mxu0
    %186 = vmatprep.mubr.f32.mxu0 0.0
    %187 = vmatmul.mubr.f32.gmra.mrb[0].mxu0 %v61
    %v188 = vpop.f32.mrb[0].mxu0
    %v189 = vadd.f32 0.0, %v188
    %v190 = vpop.f32.mrb[0].mxu0
    %191 = vmatprep.mubr.f32.mxu0 0.0
    %192 = vmatmul.mubr.f32.gmra.mrb[0].mxu0 %v64
    %v193 = vpop.f32.mrb[0].mxu0
    %v194 = vadd.f32 0.0, %v193
    %v195 = vpop.f32.mrb[0].mxu0
    %196 = vmatprep.mubr.f32.mxu0 0.0
    %197 = vmatmul.mubr.f32.gmra.mrb[0].mxu0 %v67
    %v198 = vpop.f32.mrb[0].mxu0
    %v199 = vadd.f32 0.0, %v198
    %v200 = vpop.f32.mrb[0].mxu0
    %201 = vmatprep.mubr.f32.mxu0 0.0
    %202 = vmatmul.mubr.f32.gmra.mrb[0].mxu0 %v70
    %v203 = vpop.f32.mrb[0].mxu0
    %v204 = vadd.f32 0.0, %v203
    %v205 = vpop.f32.mrb[0].mxu0
    %206 = vmatprep.mubr.f32.mxu0 0.0
    %207 = vmatmul.mubr.f32.gmra.mrb[0].mxu0 %v73
    %v208 = vpop.f32.mrb[0].mxu0
    %v209 = vadd.f32 0.0, %v208
    %v210 = vpop.f32.mrb[0].mxu0
    %211 = vmatprep.mubr.f32.mxu0 0.0
    %212 = vmatmul.mubr.f32.gmra.mrb[0].mxu0 %v76
    %v213 = vpop.f32.mrb[0].mxu0
    %v214 = vadd.f32 0.0, %v213
    %v215 = vpop.f32.mrb[0].mxu0
    %216 = vmatprep.mubr.f32.mxu0 0.0
    %217 = vmatmul.mubr.f32.gmra.mrb[0].mxu0 %v79
    %v218 = vpop.f32.mrb[0].mxu0
    %v219 = vadd.f32 0.0, %v218
    %v220 = vpop.f32.mrb[0].mxu0
    %221 = vmatprep.mubr.f32.mxu0 0.0
    %222 = vmatmul.mubr.f32.gmra.mrb[0].mxu0 %v82
    %v223 = vpop.f32.mrb[0].mxu0
    %v224 = vadd.f32 0.0, %v223
    %v225 = vpop.f32.mrb[0].mxu0
    %226 = vmatprep.mubr.f32.mxu0 0.0
    %227 = vmatmul.mubr.f32.gmra.mrb[0].mxu0 %v85
    %v228 = vpop.f32.mrb[0].mxu0
    %v229 = vadd.f32 0.0, %v228
    %v230 = vpop.f32.mrb[0].mxu0
    %231 = vdwg.mxu0
    %v232 = vld [vmem:[%s2] sm:$0x1]
    %v234 = vlaneseq
    %v235 = vshrl.u32 %v234, 7
    %v236 = vsub.s32 0, %v235
    %v237 = vrot.slane %v232, %v236
    %v239 = vmul.f32 %v154, %v237
    %v240 = vmul.f32 %v159, %v237
    %v241 = vmul.f32 %v164, %v237
    %v242 = vmul.f32 %v169, %v237
    %v243 = vmul.f32 %v174, %v237
    %v244 = vmul.f32 %v179, %v237
    %v245 = vmul.f32 %v184, %v237
    %v246 = vmul.f32 %v189, %v237
    %v247 = vmul.f32 %v194, %v237
    %v248 = vmul.f32 %v199, %v237
    %v249 = vmul.f32 %v204, %v237
    %v250 = vmul.f32 %v209, %v237
    %v251 = vmul.f32 %v214, %v237
    %v252 = vmul.f32 %v219, %v237
    %v253 = vmul.f32 %v224, %v237
    %v254 = vmul.f32 %v229, %v237
    %v255 = vld [vmem:[%s3] sm:$0x1]
    %v257 = vlaneseq
    %v258 = vshrl.u32 %v257, 7
    %v259 = vsub.s32 0, %v258
    %v260 = vrot.slane %v255, %v259
    %v262 = vadd.f32 %v239, %v260
    %v263 = vadd.f32 %v240, %v260
    %v264 = vadd.f32 %v241, %v260
    %v265 = vadd.f32 %v242, %v260
    %v266 = vadd.f32 %v243, %v260
    %v267 = vadd.f32 %v244, %v260
    %v268 = vadd.f32 %v245, %v260
    %v269 = vadd.f32 %v246, %v260
    %v270 = vadd.f32 %v247, %v260
    %v271 = vadd.f32 %v248, %v260
    %v272 = vadd.f32 %v249, %v260
    %v273 = vadd.f32 %v250, %v260
    %v274 = vadd.f32 %v251, %v260
    %v275 = vadd.f32 %v252, %v260
    %v276 = vadd.f32 %v253, %v260
    %v277 = vadd.f32 %v254, %v260
    %v278 = vxor.u32 %v262, 2147483648
    %v279 = vxor.u32 %v263, 2147483648
    %v280 = vxor.u32 %v264, 2147483648
    %v281 = vxor.u32 %v265, 2147483648
    %v282 = vxor.u32 %v266, 2147483648
    %v283 = vxor.u32 %v267, 2147483648
    %v284 = vxor.u32 %v268, 2147483648
    %v285 = vxor.u32 %v269, 2147483648
    %v286 = vxor.u32 %v270, 2147483648
    %v287 = vxor.u32 %v271, 2147483648
    %v288 = vxor.u32 %v272, 2147483648
    %v289 = vxor.u32 %v273, 2147483648
    %v290 = vxor.u32 %v274, 2147483648
    %v291 = vxor.u32 %v275, 2147483648
    %v292 = vxor.u32 %v276, 2147483648
    %v293 = vxor.u32 %v277, 2147483648
    %v294 = vmul.f32 %v278, 1.442695
    %v295 = vpow.pop %v294
    %v296 = vmul.f32 %v279, 1.442695
    %v297 = vpow.pop %v296
    %v298 = vmul.f32 %v280, 1.442695
    %v299 = vpow.pop %v298
    %v300 = vmul.f32 %v281, 1.442695
    %v301 = vpow.pop %v300
    %v302 = vmul.f32 %v282, 1.442695
    %v303 = vpow.pop %v302
    %v304 = vmul.f32 %v283, 1.442695
    %v305 = vpow.pop %v304
    %v306 = vmul.f32 %v284, 1.442695
    %v307 = vpow.pop %v306
    %v308 = vmul.f32 %v285, 1.442695
    %v309 = vpow.pop %v308
    %v310 = vmul.f32 %v286, 1.442695
    %v311 = vpow.pop %v310
    %v312 = vmul.f32 %v287, 1.442695
    %v313 = vpow.pop %v312
    %v314 = vmul.f32 %v288, 1.442695
    %v315 = vpow.pop %v314
    %v316 = vmul.f32 %v289, 1.442695
    %v317 = vpow.pop %v316
    %v318 = vmul.f32 %v290, 1.442695
    %v319 = vpow.pop %v318
    %v320 = vmul.f32 %v291, 1.442695
    %v321 = vpow.pop %v320
    %v322 = vmul.f32 %v292, 1.442695
    %v323 = vpow.pop %v322
    %v324 = vmul.f32 %v293, 1.442695
    %v325 = vpow.pop %v324
    %v326 = vadd.f32 %v295, 1.0
    %v327 = vadd.f32 %v297, 1.0
    %v328 = vadd.f32 %v299, 1.0
    %v329 = vadd.f32 %v301, 1.0
    %v330 = vadd.f32 %v303, 1.0
    %v331 = vadd.f32 %v305, 1.0
    %v332 = vadd.f32 %v307, 1.0
    %v333 = vadd.f32 %v309, 1.0
    %v334 = vadd.f32 %v311, 1.0
    %v335 = vadd.f32 %v313, 1.0
    %v336 = vadd.f32 %v315, 1.0
    %v337 = vadd.f32 %v317, 1.0
    %v338 = vadd.f32 %v319, 1.0
    %v339 = vadd.f32 %v321, 1.0
    %v340 = vadd.f32 %v323, 1.0
    %v341 = vadd.f32 %v325, 1.0
    %v342 = vrcp.pop %v326
    %v343 = vmul.f32 1.0, %v342
    %v344 = vrcp.pop %v327
    %v345 = vmul.f32 1.0, %v344
    %v346 = vrcp.pop %v328
    %v347 = vmul.f32 1.0, %v346
    %v348 = vrcp.pop %v329
    %v349 = vmul.f32 1.0, %v348
    %v350 = vrcp.pop %v330
    %v351 = vmul.f32 1.0, %v350
    %v352 = vrcp.pop %v331
    %v353 = vmul.f32 1.0, %v352
    %v354 = vrcp.pop %v332
    %v355 = vmul.f32 1.0, %v354
    %v356 = vrcp.pop %v333
    %v357 = vmul.f32 1.0, %v356
    %v358 = vrcp.pop %v334
    %v359 = vmul.f32 1.0, %v358
    %v360 = vrcp.pop %v335
    %v361 = vmul.f32 1.0, %v360
    %v362 = vrcp.pop %v336
    %v363 = vmul.f32 1.0, %v362
    %v364 = vrcp.pop %v337
    %v365 = vmul.f32 1.0, %v364
    %v366 = vrcp.pop %v338
    %v367 = vmul.f32 1.0, %v366
    %v368 = vrcp.pop %v339
    %v369 = vmul.f32 1.0, %v368
    %v370 = vrcp.pop %v340
    %v371 = vmul.f32 1.0, %v370
    %v372 = vrcp.pop %v341
    %v373 = vmul.f32 1.0, %v372
    %v374 = vmul.f32 %v262, %v343
    %v375 = vmul.f32 %v263, %v345
    %v376 = vmul.f32 %v264, %v347
    %v377 = vmul.f32 %v265, %v349
    %v378 = vmul.f32 %v266, %v351
    %v379 = vmul.f32 %v267, %v353
    %v380 = vmul.f32 %v268, %v355
    %v381 = vmul.f32 %v269, %v357
    %v382 = vmul.f32 %v270, %v359
    %v383 = vmul.f32 %v271, %v361
    %v384 = vmul.f32 %v272, %v363
    %v385 = vmul.f32 %v273, %v365
    %v386 = vmul.f32 %v274, %v367
    %v387 = vmul.f32 %v275, %v369
    %v388 = vmul.f32 %v276, %v371
    %v389 = vmul.f32 %v277, %v373
    %390 = vst [vmem:[#allocation2] sm:$0xff] %v374
    %391 = vst [vmem:[#allocation2 + $0x8] sm:$0xff] %v375
    %392 = vst [vmem:[#allocation2 + $0x10] sm:$0xff] %v376
    %393 = vst [vmem:[#allocation2 + $0x18] sm:$0xff] %v377
    %394 = vst [vmem:[#allocation2 + $0x20] sm:$0xff] %v378
    %395 = vst [vmem:[#allocation2 + $0x28] sm:$0xff] %v379
    %396 = vst [vmem:[#allocation2 + $0x30] sm:$0xff] %v380
    %397 = vst [vmem:[#allocation2 + $0x38] sm:$0xff] %v381
    %398 = vst [vmem:[#allocation2 + $0x40] sm:$0xff] %v382
    %399 = vst [vmem:[#allocation2 + $0x48] sm:$0xff] %v383
    %400 = vst [vmem:[#allocation2 + $0x50] sm:$0xff] %v384
    %401 = vst [vmem:[#allocation2 + $0x58] sm:$0xff] %v385
    %402 = vst [vmem:[#allocation2 + $0x60] sm:$0xff] %v386
    %403 = vst [vmem:[#allocation2 + $0x68] sm:$0xff] %v387
    %404 = vst [vmem:[#allocation2 + $0x70] sm:$0xff] %v388
    %405 = vst [vmem:[#allocation2 + $0x78] sm:$0xff] %v389
    // Predicated region
    $region18: #{tpu_custom_call.1} parent=1 // pred_check
      _
    $region19: #{tpu_custom_call.1} parent=1 // pred_check_branch
      %407 = sbr.rel (0) target = $region21
    $region20: #{tpu_custom_call.1} parent=1 // pred_region
      %s409 = ssub.s32 2048, 2048
      %410 = vsyncadd [#allocation3], %s409
      %s411 = sshll.u32 [#allocation2], 4
      %s412 = int_to_ptr.vmem [resolvable:$true] %s411
      %417 = dma.vmem_to_hbm [thread:$0]  %s412, 2048, %s4, [#allocation3], 128, 128, 8
    $region21: #{tpu_custom_call.1} parent=1 // pred_fallthru
      _
    // Predicated region
    $region22: #{tpu_custom_call.1} parent=1 // pred_check
      _
    $region23: #{tpu_custom_call.1} parent=1 // pred_check_branch
      %419 = sbr.rel (0) target = $region25
    $region24: #{tpu_custom_call.1} parent=1 // pred_region
      %420 = dma.done [#allocation3], 2048
    $region25: #{tpu_custom_call.1} parent=1 // pred_fallthru
      _
    %421 = vsyncpa [#allocation3], 1

</llo_original>
